<compile_context>
chip_gen: v5e
topology: v5e:2x2
jax: 0.10.0
libtpu: 0.0.40
codegen_flags: <defaults>
</compile_context>

<pallas_src>
import jax
import jax.numpy as jnp
from jax.experimental import pallas as pl
from jax.experimental.pallas import tpu as pltpu


def _round_up(x, m):
    return (x + m - 1) // m * m


def _vmem_capacity_bytes():
    try:
        return int(pltpu.get_tpu_info().vmem_capacity_bytes)
    except Exception:
        return 64 * 1024 * 1024  # conservative default (v7x per-TensorCore VMEM)


def _pick_tiles(n):
    """Generation-aware attention tile sizes."""
    try:
        kind = jax.devices()[0].device_kind.lower()
    except Exception:
        kind = ""
    # v6e/v7x: 256x256 MXU -> 256 tiles; v5e (and older/unknown): 128 is optimal/safe.
    base = 256 if ("v6" in kind or "v7" in kind) else 128
    n128 = _round_up(max(n, 1), 128)
    tq = min(base, n128)
    tk = min(base, n128)
    # Keep >= 2 query tiles so the "parallel" axis can shard across v7x's 2 TCs.
    if tq > 128 and (n128 // tq) < 2:
        tq = max(128, (n128 // 2) // 128 * 128)
    return tq, tk


# --------------------------------------------------------------------------
# Kernel 1: packed projection  [seq_fts | f_1 f_2] = seq_tile @ [W_fts | w_f1 w_f2]
# --------------------------------------------------------------------------
def _proj_kernel(x_ref, w_ref, brow_ref, fts_ref, f12_ref):
    acc = jnp.dot(x_ref[...], w_ref[...], preferred_element_type=jnp.float32)
    o_pad = fts_ref.shape[1]
    fts_ref[...] = acc[:, :o_pad].astype(fts_ref.dtype)   # bf16 features, lane-dense
    f12_ref[...] = acc[:, o_pad:] + brow_ref[...]          # f32 logits + (b_f1, b_f2)


# --------------------------------------------------------------------------
# Kernel 2: tiled attention (leaky_relu -> batch-axis softmax -> coefs @ seq_fts)
# --------------------------------------------------------------------------
def _make_attn_kernel(tk, resident, batch):
    def kernel(f1_ref, f2_ref, fts_ref, bias_ref, out_ref, acc_ref):
        ki = pl.program_id(1)

        @pl.when(ki == 0)
        def _init():
            acc_ref[...] = jnp.zeros_like(acc_ref)

        # f_1 query tile: column 0 of the packed projection output; the query
        # axis is already on sublanes, so no XLU relayout is needed.
        f1q = f1_ref[...][:, :, 0:1]                   # (B, TQ, 1) f32
        f2 = f2_ref[...]                               # (B, TK)    f32, keys on lanes
        logits = f1q + f2[:, None, :]                  # (B, TQ, TK)

        # F.leaky_relu default slope, 2 VPU ops.
        x = jnp.maximum(logits, 0.01 * logits)

        # F.softmax with implicit dim on a 3-D tensor -> softmax over dim 0
        # (batch).  Whole batch present in every tile, so this is exact.
        if batch == 2:
            # Two-way softmax == sigmoid of the difference (halves the exp work,
            # drops the max/sum passes).
            z = x[0] - x[1]
            c0 = pl.reciprocal(1.0 + jnp.exp(-z), approx=True)
            coefs = jnp.stack([c0, 1.0 - c0], axis=0)
        else:
            m = jnp.max(x, axis=0, keepdims=True)
            e = jnp.exp(x - m)
            coefs = e * pl.reciprocal(jnp.sum(e, axis=0, keepdims=True), approx=True)
        coefs = coefs.astype(fts_ref.dtype)            # bf16 for the MXU

        if resident:
            k0 = pl.multiple_of(ki * tk, tk)
            fts = fts_ref[:, pl.ds(k0, tk), :]         # slice of the VMEM-resident block
        else:
            fts = fts_ref[...]                         # streamed key tile

        # One batched MXU contraction: (B,TQ,TK) x (B,TK,OP) -> (B,TQ,OP), f32 acc.
        acc_ref[...] += jax.lax.dot_general(
            coefs, fts,
            dimension_numbers=(((2,), (1,)), ((0,), (0,))),
            preferred_element_type=jnp.float32)

        @pl.when(ki == pl.num_programs(1) - 1)
        def _store():
            # ret = vals + self.bias ; ACT_FN = relu
            out_ref[...] = jnp.maximum(acc_ref[...] + bias_ref[...], 0.0
                                       ).astype(out_ref.dtype)

    return kernel


def attn_head(seq, w_fts, w_f1, b_f1, w_f2, b_f2, bias, *, tq=None, tk=None):
    """seq: (B, N, D); w_fts: (D, O) (= W^T of nn.Linear, no bias); w_f1/w_f2: (D,);
    b_f1/b_f2: scalars; bias: scalar (self.bias)."""
    B, N, D = seq.shape
    O = w_fts.shape[1]
    assert D == O, "module applies f_1/f_2 (declared in_features=out_size) to seq"

    if tq is None or tk is None:
        atq, atk = _pick_tiles(N)
        tq = tq or atq
        tk = tk or atk

    d_pad = _round_up(D, 128)            # lane-dense contraction axis
    o_pad = _round_up(O, 128)            # lane-dense feature / output axis
    n_pad = _round_up(N, max(tq, tk))
    w_cols = o_pad + 128                 # packed weight: [W_fts | pad | w_f1 w_f2 | pad]
    vmem_cap = _vmem_capacity_bytes()

    # Zero padding is exact: zero rows/cols contribute nothing to the matmuls,
    # padded keys multiply zero feature rows, padded queries are sliced off,
    # and the softmax is over the batch axis so padding never enters it.
    seq_p = jnp.zeros((B, n_pad, d_pad), jnp.bfloat16)
    seq_p = seq_p.at[:, :N, :D].set(seq.astype(jnp.bfloat16))
    seq2d = seq_p.reshape(B * n_pad, d_pad)

    w_pack = jnp.zeros((d_pad, w_cols), jnp.float32)
    w_pack = w_pack.at[:D, :O].set(w_fts)
    w_pack = w_pack.at[:D, o_pad].set(w_f1)
    w_pack = w_pack.at[:D, o_pad + 1].set(w_f2)
    w_pack = w_pack.astype(jnp.bfloat16)

    brow = jnp.zeros((1, 128), jnp.float32)
    brow = brow.at[0, 0].set(b_f1).at[0, 1].set(b_f2)

    bn = B * n_pad
    # Streaming kernel with a resident weight block: use the biggest row tile
    # that divides bn (bn is always a multiple of 128).
    t_rows = next(t for t in (1024, 512, 256, 128) if bn % t == 0)

    k1_ws = (2 * (t_rows * d_pad * 2 + t_rows * o_pad * 2 + t_rows * 128 * 4)
             + 2 * d_pad * w_cols * 2 + 2 * 128 * 4)
    k1_vmem = min(max(32 << 20, k1_ws + (4 << 20)), int(0.9 * vmem_cap))
    # TODO(synk): for very large D/O the resident packed-weight block needs a K
    # grid axis (f32 accumulator) to fit v7x's 64 MiB VMEM; not needed here.

    # ---------------- kernel 1: packed projection ----------------
    fts2d, f12 = pl.pallas_call(
        _proj_kernel,
        out_shape=(jax.ShapeDtypeStruct((bn, o_pad), jnp.bfloat16),
                   jax.ShapeDtypeStruct((bn, 128), jnp.float32)),
        grid=(bn // t_rows,),
        in_specs=[pl.BlockSpec((t_rows, d_pad), lambda i: (i, 0)),
                  pl.BlockSpec((d_pad, w_cols), lambda i: (0, 0)),
                  pl.BlockSpec((1, 128), lambda i: (0, 0))],
        out_specs=(pl.BlockSpec((t_rows, o_pad), lambda i: (i, 0)),
                   pl.BlockSpec((t_rows, 128), lambda i: (i, 0))),
        compiler_params=pltpu.CompilerParams(
            dimension_semantics=("parallel",),
            vmem_limit_bytes=k1_vmem),
    )(seq2d, w_pack, brow)

    seq_fts = fts2d.reshape(B, n_pad, o_pad)      # bf16, lane-dense
    f1_full = f12.reshape(B, n_pad, 128)          # f32; col 0 = f_1 (+b_f1), queries on sublanes
    f2 = f12[:, 1].reshape(B, n_pad)              # f32; f_2 (+b_f2), keys on lanes
    bias_row = jnp.full((1, 1, o_pad), bias, jnp.float32)

    nq, nk = n_pad // tq, n_pad // tk

    # ------- decide whether seq_fts stays VMEM-resident across the key loop -------
    fts_bytes = B * n_pad * o_pad * 2
    per_step = (2 * (B * tq * 128 * 4)      # f1 blocks (double-buffered)
                + 2 * (8 * tk * 4)          # f2 blocks (sublane-padded)
                + 2 * (B * tq * o_pad * 4)  # output blocks
                + B * tq * o_pad * 4        # f32 accumulator scratch
                + 2 * o_pad * 4)            # bias row
    resident_ws = 2 * fts_bytes + per_step  # resident block may be double-buffered
    resident = resident_ws <= int(0.6 * vmem_cap)

    if resident:
        fts_spec = pl.BlockSpec((B, n_pad, o_pad), lambda qi, ki: (0, 0, 0))
        k2_vmem = min(max(32 << 20, resident_ws + (4 << 20)), int(0.9 * vmem_cap))
    else:
        # Fallback: stream seq_fts key tiles (re-read once per query tile).
        fts_spec = pl.BlockSpec((B, tk, o_pad), lambda qi, ki: (0, ki, 0))
        k2_vmem = min(32 << 20, int(0.9 * vmem_cap))

    cost = pl.CostEstimate(
        flops=int(2 * B * n_pad * n_pad * o_pad + 8 * B * n_pad * n_pad),
        transcendentals=int(B * n_pad * n_pad),
        bytes_accessed=int((fts_bytes if resident else fts_bytes * nq)
                           + 4 * B * n_pad * 128        # f1 (packed) read per q tile
                           + 4 * B * n_pad * nq         # f2 re-read per q tile
                           + 4 * B * n_pad * o_pad))    # output writeback

    # ---------------- kernel 2: tiled attention ----------------
    out_p = pl.pallas_call(
        _make_attn_kernel(tk, resident, B),
        out_shape=jax.ShapeDtypeStruct((B, n_pad, o_pad), jnp.float32),
        grid=(nq, nk),
        in_specs=[pl.BlockSpec((B, tq, 128), lambda qi, ki: (0, qi, 0)),
                  pl.BlockSpec((B, tk), lambda qi, ki: (0, ki)),
                  fts_spec,
                  pl.BlockSpec((1, 1, o_pad), lambda qi, ki: (0, 0, 0))],
        out_specs=pl.BlockSpec((B, tq, o_pad), lambda qi, ki: (0, qi, 0)),
        scratch_shapes=[pltpu.VMEM((B, tq, o_pad), jnp.float32)],
        compiler_params=pltpu.CompilerParams(
            dimension_semantics=("parallel", "arbitrary"),
            vmem_limit_bytes=k2_vmem),
        cost_estimate=cost,
    )(f1_full, f2, seq_fts, bias_row)

    return out_p[:, :N, :O]


# --------------------------------------------------------------------------
# Reference (pure JAX, f32) with the exact PyTorch semantics
# --------------------------------------------------------------------------
def _reference(seq, w_fts, w_f1, b_f1, w_f2, b_f2, bias):
    seq_fts = seq @ w_fts
    f1 = seq @ w_f1 + b_f1
    f2 = seq @ w_f2 + b_f2
    logits = f1[:, :, None] + f2[:, None, :]
    x = jnp.where(logits > 0, logits, 0.01 * logits)
    coefs = jax.nn.softmax(x, axis=0)          # implicit dim=0 on 3-D input
    vals = jnp.einsum('bij,bjo->bio', coefs, seq_fts)
    return jnp.maximum(vals + bias, 0.0)


def _check(out, ref, name):
    err = float(jnp.max(jnp.abs(out - ref)))
    scale = max(float(jnp.max(jnp.abs(ref))), 1.0)
    rel = err / scale
    # bf16 MXU operands + approx reciprocal -> scale-aware bound.
    assert rel < 0.06, f"{name}: max abs err {err:.4f} (rel {rel:.4f}, scale {scale:.2f})"


if __name__ == "__main__":
    key = jax.random.PRNGKey(0)

    def make_case(key, B, N, D):
        ks = jax.random.split(key, 6)
        seq = jax.random.normal(ks[0], (B, N, D), jnp.float32)
        # Deterministic synthetic parameters (shapes from __init__; not a checkpoint).
        w_fts = jax.random.normal(ks[1], (D, D), jnp.float32) * 0.1  # W_fts^T of nn.Linear
        w_f1 = jax.random.normal(ks[2], (D,), jnp.float32) * 0.1
        w_f2 = jax.random.normal(ks[3], (D,), jnp.float32) * 0.1
        b_f1 = jax.random.normal(ks[4], (), jnp.float32) * 0.1
        b_f2 = jax.random.normal(ks[5], (), jnp.float32) * 0.1
        bias = jnp.zeros((), jnp.float32)  # self.weight_init(): zeros_(self.bias)
        return seq, w_fts, w_f1, b_f1, w_f2, b_f2, bias

    # Case 1: B=2 exercises the fused sigmoid softmax path; N/D deliberately
    # not tile multiples to exercise the padding path.
    args1 = make_case(jax.random.fold_in(key, 1), B=2, N=200, D=64)
    out1 = attn_head(*args1)
    jax.block_until_ready(out1)
    assert out1.shape == (2, 200, 64)
    _check(out1, _reference(*args1), "B=2 case")

    # Case 2: B=3 exercises the general batch-axis softmax path.
    args2 = make_case(jax.random.fold_in(key, 2), B=3, N=96, D=32)
    out2 = attn_head(*args2)
    jax.block_until_ready(out2)
    assert out2.shape == (3, 96, 32)
    _check(out2, _reference(*args2), "B=3 case")

    print("KERNEL_OK")
</pallas_src>

<mosaic_0001>
module attributes {stable_mosaic.version = 11 : i64} {
  func.func @_proj_kernel(%arg0: i32, %arg1: memref<512x128xbf16, #tpu.memory_space<vmem>>, %arg2: memref<128x256xbf16, #tpu.memory_space<vmem>>, %arg3: memref<1x128xf32, #tpu.memory_space<vmem>>, %arg4: memref<512x128xbf16, #tpu.memory_space<vmem>>, %arg5: memref<512x128xf32, #tpu.memory_space<vmem>>) attributes {dimension_semantics = [#tpu.dimension_semantics<parallel>], iteration_bounds = array<i64: 1>, scalar_prefetch = 0 : i64, scratch_operands = 0 : i64, tpu.core_type = #tpu.core_type<tc>, window_params = [{transform_indices = @transform_0, window_bounds = array<i64: 512, 128>}, {pipeline_mode = #tpu.pipeline_mode<synchronous>, transform_indices = @transform_1, window_bounds = array<i64: 128, 256>}, {pipeline_mode = #tpu.pipeline_mode<synchronous>, transform_indices = @transform_2, window_bounds = array<i64: 1, 128>}, {transform_indices = @transform_3, window_bounds = array<i64: 512, 128>}, {transform_indices = @transform_4, window_bounds = array<i64: 512, 128>}]} {
    %c0 = arith.constant 0 : index
    %c0_0 = arith.constant 0 : index
    %0 = vector.load %arg1[%c0, %c0_0] : memref<512x128xbf16, #tpu.memory_space<vmem>>, vector<512x128xbf16>
    %c0_1 = arith.constant 0 : index
    %c0_2 = arith.constant 0 : index
    %1 = vector.load %arg2[%c0_1, %c0_2] : memref<128x256xbf16, #tpu.memory_space<vmem>>, vector<128x256xbf16>
    %cst = arith.constant dense<0.000000e+00> : vector<512x256xf32>
    %2 = tpu.matmul %0, %1, %cst {dimension_numbers = #tpu.dot_dimension_numbers<[1], [0], [0], [1], [0, 0, 1, 1], [], []>} : vector<512x128xbf16>, vector<128x256xbf16>, vector<512x256xf32> -> vector<512x256xf32>
    %3 = vector.extract_strided_slice %2 {offsets = [0, 0], sizes = [512, 128], strides = [1, 1]} : vector<512x256xf32> to vector<512x128xf32>
    %4 = arith.truncf %3 : vector<512x128xf32> to vector<512x128xbf16>
    %c0_3 = arith.constant 0 : index
    %c0_4 = arith.constant 0 : index
    %5 = vector.load %arg4[%c0_3, %c0_4] : memref<512x128xbf16, #tpu.memory_space<vmem>>, vector<512x128xbf16>
    tpu.vector_store %arg4[%c0_3, %c0_4], %4 {strides = array<i32>} : memref<512x128xbf16, #tpu.memory_space<vmem>>, vector<512x128xbf16>,
    %6 = vector.extract_strided_slice %2 {offsets = [0, 128], sizes = [512, 128], strides = [1, 1]} : vector<512x256xf32> to vector<512x128xf32>
    %c0_5 = arith.constant 0 : index
    %c0_6 = arith.constant 0 : index
    %7 = vector.load %arg3[%c0_5, %c0_6] : memref<1x128xf32, #tpu.memory_space<vmem>>, vector<1x128xf32>
    %8 = vector.broadcast %7 : vector<1x128xf32> to vector<512x128xf32>
    %9 = arith.addf %6, %8 : vector<512x128xf32>
    %c0_7 = arith.constant 0 : index
    %c0_8 = arith.constant 0 : index
    %10 = vector.load %arg5[%c0_7, %c0_8] : memref<512x128xf32, #tpu.memory_space<vmem>>, vector<512x128xf32>
    tpu.vector_store %arg5[%c0_7, %c0_8], %9 {strides = array<i32>} : memref<512x128xf32, #tpu.memory_space<vmem>>, vector<512x128xf32>,
    return
  }
  func.func @transform_0(%arg0: i32) -> (i32, i32) {
    %c0_i32 = arith.constant 0 : i32
    %c0_i32_0 = arith.constant 0 : i32
    return %arg0, %c0_i32 : i32, i32
  }
  func.func @transform_1(%arg0: i32) -> (i32, i32) {
    %c0_i32 = arith.constant 0 : i32
    %c0_i32_0 = arith.constant 0 : i32
    %c0_i32_1 = arith.constant 0 : i32
    return %c0_i32, %c0_i32_0 : i32, i32
  }
  func.func @transform_2(%arg0: i32) -> (i32, i32) {
    %c0_i32 = arith.constant 0 : i32
    %c0_i32_0 = arith.constant 0 : i32
    %c0_i32_1 = arith.constant 0 : i32
    return %c0_i32, %c0_i32_0 : i32, i32
  }
  func.func @transform_3(%arg0: i32) -> (i32, i32) {
    %c0_i32 = arith.constant 0 : i32
    %c0_i32_0 = arith.constant 0 : i32
    return %arg0, %c0_i32 : i32, i32
  }
  func.func @transform_4(%arg0: i32) -> (i32, i32) {
    %c0_i32 = arith.constant 0 : i32
    %c0_i32_0 = arith.constant 0 : i32
    return %arg0, %c0_i32 : i32, i32
  }
}

</mosaic_0001>

<llo_original>
// kernel: tpu_custom_call.1
$region0: #{tpu_custom_call.1}
  #allocation0 [shape = 'u32[]', space=smem, size = 0x4, offset = 0x4, fixed_abs, tag = 'smem constant byte address 0x4 - core index']
  #allocation1 [shape = 'u32[72,128]{1,0:T(1,128)}', space=vmem, size = 0x9000, scoped, tag = 'internal scratch']
  %s0 = inlined_call_operand.hbm [shape: bf16[512,128], index: 0, kind: input, shape index: {}]
  %s1 = inlined_call_operand.hbm [shape: bf16[128,256], index: 1, kind: input, shape index: {}]
  %s2 = inlined_call_operand.vmem [shape: f32[1,128], index: 2, kind: input, shape index: {}]
  %s3 = inlined_call_operand.hbm [shape: bf16[512,128], index: 3, kind: output, shape index: {0}]
  %s4 = inlined_call_operand.hbm [shape: f32[512,128], index: 4, kind: output, shape index: {1}]
  %5 = xla_tuple %s3, %s4
  %s6 = sld [smem:[#allocation0]]
  $region38: #{tpu_custom_call.1} parent=0
    _
  %s8 = ssub.s32 1, %s6
  %s9 = scalar_select 0, %s8, %s6
  $region1: #{tpu_custom_call.1} parent=0
    #allocation2 [shape = 'u8[131072]{0}', space=vmem, size = 0x20000, scoped, tag = 'input window, operand 0, single buffered']
    #allocation3 [shape = 's32[1]{0}', space=sflag, size = 0x4, scoped, tag = 'scoped memory for tpu_custom_call.1']
    #allocation4 [shape = 's32[1]{0}', space=sflag, size = 0x4, scoped, tag = 'scoped memory for tpu_custom_call.1']
    #allocation5 [shape = 'u8[65536]{0}', space=vmem, size = 0x10000, scoped, tag = 'input window, operand 1, single buffered']
    #allocation6 [shape = 's32[1]{0}', space=sflag, size = 0x4, scoped, tag = 'scoped memory for tpu_custom_call.1']
    #allocation7 [shape = 'u8[131072]{0}', space=vmem, size = 0x20000, scoped, tag = 'output window, operand 0, single buffered']
    #allocation8 [shape = 'u8[262144]{0}', space=vmem, size = 0x40000, scoped, tag = 'output window, operand 1, single buffered']
    #allocation9 [shape = 's32[1]{0}', space=sflag, size = 0x4, scoped, tag = 'scoped memory for tpu_custom_call.1']
    %10 = vsyncpa [#allocation3], 0
    %11 = vsyncpa [#allocation6], 0
    %12 = vsyncpa [#allocation4], 0
    %13 = vsyncpa [#allocation9], 0
    // Predicated region
    $region2: #{tpu_custom_call.1} parent=1 // pred_check
      _
    $region3: #{tpu_custom_call.1} parent=1 // pred_check_branch
      %15 = sbr.rel (0) target = $region5
    $region4: #{tpu_custom_call.1} parent=1 // pred_region
      %17 = vsyncadd [#allocation3], 0
      %s18 = sshll.u32 %s0, 4
      %s19 = int_to_ptr.hbm [resolvable:$true] %s18
      %s20 = sshll.u32 [#allocation2], 4
      %s21 = int_to_ptr.vmem [resolvable:$true] %s20
      %26 = dma.hbm_to_vmem [thread:$0]  %s19, 4096, %s21, [#allocation3], 64, 64, 4
    $region5: #{tpu_custom_call.1} parent=1 // pred_fallthru
      _
    // Predicated region
    $region6: #{tpu_custom_call.1} parent=1 // pred_check
      _
    $region7: #{tpu_custom_call.1} parent=1 // pred_check_branch
      %28 = sbr.rel (0) target = $region9
    $region8: #{tpu_custom_call.1} parent=1 // pred_region
      %30 = vsyncadd [#allocation6], 0
      %s31 = sshll.u32 %s1, 4
      %s32 = int_to_ptr.hbm [resolvable:$true] %s31
      %s33 = sshll.u32 [#allocation5], 4
      %s34 = int_to_ptr.vmem [resolvable:$true] %s33
      %39 = dma.hbm_to_vmem [thread:$0]  %s32, 2048, %s34, [#allocation6], 128, 128, 8
    $region9: #{tpu_custom_call.1} parent=1 // pred_fallthru
      _
    // Predicated region
    $region10: #{tpu_custom_call.1} parent=1 // pred_check
      _
    $region11: #{tpu_custom_call.1} parent=1 // pred_check_branch
      %41 = sbr.rel (0) target = $region13
    $region12: #{tpu_custom_call.1} parent=1 // pred_region
      _
    $region13: #{tpu_custom_call.1} parent=1 // pred_fallthru
      _
    // Predicated region
    $region14: #{tpu_custom_call.1} parent=1 // pred_check
      _
    $region15: #{tpu_custom_call.1} parent=1 // pred_check_branch
      %43 = sbr.rel (0) target = $region17
    $region16: #{tpu_custom_call.1} parent=1 // pred_region
      %45 = dma.done [#allocation3], 4096
    $region17: #{tpu_custom_call.1} parent=1 // pred_fallthru
      _
    // Predicated region
    $region18: #{tpu_custom_call.1} parent=1 // pred_check
      _
    $region19: #{tpu_custom_call.1} parent=1 // pred_check_branch
      %47 = sbr.rel (0) target = $region21
    $region20: #{tpu_custom_call.1} parent=1 // pred_region
      %49 = dma.done [#allocation6], 2048
    $region21: #{tpu_custom_call.1} parent=1 // pred_fallthru
      _
    %v50 = vld [vmem:[#allocation2] sm:$0xf]
    %v51 = vld [vmem:[#allocation2 + $0x4] sm:$0xf]
    %v52 = vld [vmem:[#allocation2 + $0x8] sm:$0xf]
    %v53 = vld [vmem:[#allocation2 + $0xc] sm:$0xf]
    %v54 = vld [vmem:[#allocation2 + $0x10] sm:$0xf]
    %v55 = vld [vmem:[#allocation2 + $0x14] sm:$0xf]
    %v56 = vld [vmem:[#allocation2 + $0x18] sm:$0xf]
    %v57 = vld [vmem:[#allocation2 + $0x1c] sm:$0xf]
    %v58 = vld [vmem:[#allocation2 + $0x20] sm:$0xf]
    %v59 = vld [vmem:[#allocation2 + $0x24] sm:$0xf]
    %v60 = vld [vmem:[#allocation2 + $0x28] sm:$0xf]
    %v61 = vld [vmem:[#allocation2 + $0x2c] sm:$0xf]
    %v62 = vld [vmem:[#allocation2 + $0x30] sm:$0xf]
    %v63 = vld [vmem:[#allocation2 + $0x34] sm:$0xf]
    %v64 = vld [vmem:[#allocation2 + $0x38] sm:$0xf]
    %v65 = vld [vmem:[#allocation2 + $0x3c] sm:$0xf]
    %v66 = vld [vmem:[#allocation2 + $0x40] sm:$0xf]
    %v67 = vld [vmem:[#allocation2 + $0x44] sm:$0xf]
    %v68 = vld [vmem:[#allocation2 + $0x48] sm:$0xf]
    %v69 = vld [vmem:[#allocation2 + $0x4c] sm:$0xf]
    %v70 = vld [vmem:[#allocation2 + $0x50] sm:$0xf]
    %v71 = vld [vmem:[#allocation2 + $0x54] sm:$0xf]
    %v72 = vld [vmem:[#allocation2 + $0x58] sm:$0xf]
    %v73 = vld [vmem:[#allocation2 + $0x5c] sm:$0xf]
    %v74 = vld [vmem:[#allocation2 + $0x60] sm:$0xf]
    %v75 = vld [vmem:[#allocation2 + $0x64] sm:$0xf]
    %v76 = vld [vmem:[#allocation2 + $0x68] sm:$0xf]
    %v77 = vld [vmem:[#allocation2 + $0x6c] sm:$0xf]
    %v78 = vld [vmem:[#allocation2 + $0x70] sm:$0xf]
    %v79 = vld [vmem:[#allocation2 + $0x74] sm:$0xf]
    %v80 = vld [vmem:[#allocation2 + $0x78] sm:$0xf]
    %v81 = vld [vmem:[#allocation2 + $0x7c] sm:$0xf]
    %v82 = vld [vmem:[#allocation2 + $0x80] sm:$0xf]
    %v83 = vld [vmem:[#allocation2 + $0x84] sm:$0xf]
    %v84 = vld [vmem:[#allocation2 + $0x88] sm:$0xf]
    %v85 = vld [vmem:[#allocation2 + $0x8c] sm:$0xf]
    %v86 = vld [vmem:[#allocation2 + $0x90] sm:$0xf]
    %v87 = vld [vmem:[#allocation2 + $0x94] sm:$0xf]
    %v88 = vld [vmem:[#allocation2 + $0x98] sm:$0xf]
    %v89 = vld [vmem:[#allocation2 + $0x9c] sm:$0xf]
    %v90 = vld [vmem:[#allocation2 + $0xa0] sm:$0xf]
    %v91 = vld [vmem:[#allocation2 + $0xa4] sm:$0xf]
    %v92 = vld [vmem:[#allocation2 + $0xa8] sm:$0xf]
    %v93 = vld [vmem:[#allocation2 + $0xac] sm:$0xf]
    %v94 = vld [vmem:[#allocation2 + $0xb0] sm:$0xf]
    %v95 = vld [vmem:[#allocation2 + $0xb4] sm:$0xf]
    %v96 = vld [vmem:[#allocation2 + $0xb8] sm:$0xf]
    %v97 = vld [vmem:[#allocation2 + $0xbc] sm:$0xf]
    %v98 = vld [vmem:[#allocation2 + $0xc0] sm:$0xf]
    %v99 = vld [vmem:[#allocation2 + $0xc4] sm:$0xf]
    %v100 = vld [vmem:[#allocation2 + $0xc8] sm:$0xf]
    %v101 = vld [vmem:[#allocation2 + $0xcc] sm:$0xf]
    %v102 = vld [vmem:[#allocation2 + $0xd0] sm:$0xf]
    %v103 = vld [vmem:[#allocation2 + $0xd4] sm:$0xf]
    %v104 = vld [vmem:[#allocation2 + $0xd8] sm:$0xf]
    %v105 = vld [vmem:[#allocation2 + $0xdc] sm:$0xf]
    %v106 = vld [vmem:[#allocation2 + $0xe0] sm:$0xf]
    %v107 = vld [vmem:[#allocation2 + $0xe4] sm:$0xf]
    %v108 = vld [vmem:[#allocation2 + $0xe8] sm:$0xf]
    %v109 = vld [vmem:[#allocation2 + $0xec] sm:$0xf]
    %v110 = vld [vmem:[#allocation2 + $0xf0] sm:$0xf]
    %v111 = vld [vmem:[#allocation2 + $0xf4] sm:$0xf]
    %v112 = vld [vmem:[#allocation2 + $0xf8] sm:$0xf]
    %v113 = vld [vmem:[#allocation2 + $0xfc] sm:$0xf]
    %v114 = vld [vmem:[#allocation5] sm:$0xff]
    %v115 = vld [vmem:[#allocation5 + $0x8] sm:$0xff]
    %v116 = vld [vmem:[#allocation5 + $0x10] sm:$0xff]
    %v117 = vld [vmem:[#allocation5 + $0x18] sm:$0xff]
    %v118 = vld [vmem:[#allocation5 + $0x20] sm:$0xff]
    %v119 = vld [vmem:[#allocation5 + $0x28] sm:$0xff]
    %v120 = vld [vmem:[#allocation5 + $0x30] sm:$0xff]
    %v121 = vld [vmem:[#allocation5 + $0x38] sm:$0xff]
    %v122 = vld [vmem:[#allocation5 + $0x40] sm:$0xff]
    %v123 = vld [vmem:[#allocation5 + $0x48] sm:$0xff]
    %v124 = vld [vmem:[#allocation5 + $0x50] sm:$0xff]
    %v125 = vld [vmem:[#allocation5 + $0x58] sm:$0xff]
    %v126 = vld [vmem:[#allocation5 + $0x60] sm:$0xff]
    %v127 = vld [vmem:[#allocation5 + $0x68] sm:$0xff]
    %v128 = vld [vmem:[#allocation5 + $0x70] sm:$0xff]
    %v129 = vld [vmem:[#allocation5 + $0x78] sm:$0xff]
    %v194 = vunpack.c.l.b16 %v50
    %v195 = vunpack.c.l.b16 %v51
    %v196 = vunpack.c.l.b16 %v52
    %v197 = vunpack.c.l.b16 %v53
    %v198 = vunpack.c.l.b16 %v54
    %v199 = vunpack.c.l.b16 %v55
    %v200 = vunpack.c.l.b16 %v56
    %v201 = vunpack.c.l.b16 %v57
    %v202 = vunpack.c.l.b16 %v58
    %v203 = vunpack.c.l.b16 %v59
    %v204 = vunpack.c.l.b16 %v60
    %v205 = vunpack.c.l.b16 %v61
    %v206 = vunpack.c.l.b16 %v62
    %v207 = vunpack.c.l.b16 %v63
    %v208 = vunpack.c.l.b16 %v64
    %v209 = vunpack.c.l.b16 %v65
    %v210 = vunpack.c.l.b16 %v66
    %v211 = vunpack.c.l.b16 %v67
    %v212 = vunpack.c.l.b16 %v68
    %v213 = vunpack.c.l.b16 %v69
    %v214 = vunpack.c.l.b16 %v70
    %v215 = vunpack.c.l.b16 %v71
    %v216 = vunpack.c.l.b16 %v72
    %v217 = vunpack.c.l.b16 %v73
    %v218 = vunpack.c.l.b16 %v74
    %v219 = vunpack.c.l.b16 %v75
    %v220 = vunpack.c.l.b16 %v76
    %v221 = vunpack.c.l.b16 %v77
    %v222 = vunpack.c.l.b16 %v78
    %v223 = vunpack.c.l.b16 %v79
    %v224 = vunpack.c.l.b16 %v80
    %v225 = vunpack.c.l.b16 %v81
    %v226 = vunpack.c.l.b16 %v82
    %v227 = vunpack.c.l.b16 %v83
    %v228 = vunpack.c.l.b16 %v84
    %v229 = vunpack.c.l.b16 %v85
    %v230 = vunpack.c.l.b16 %v86
    %v231 = vunpack.c.l.b16 %v87
    %v232 = vunpack.c.l.b16 %v88
    %v233 = vunpack.c.l.b16 %v89
    %v234 = vunpack.c.l.b16 %v90
    %v235 = vunpack.c.l.b16 %v91
    %v236 = vunpack.c.l.b16 %v92
    %v237 = vunpack.c.l.b16 %v93
    %v238 = vunpack.c.l.b16 %v94
    %v239 = vunpack.c.l.b16 %v95
    %v240 = vunpack.c.l.b16 %v96
    %v241 = vunpack.c.l.b16 %v97
    %v242 = vunpack.c.l.b16 %v98
    %v243 = vunpack.c.l.b16 %v99
    %v244 = vunpack.c.l.b16 %v100
    %v245 = vunpack.c.l.b16 %v101
    %v246 = vunpack.c.l.b16 %v102
    %v247 = vunpack.c.l.b16 %v103
    %v248 = vunpack.c.l.b16 %v104
    %v249 = vunpack.c.l.b16 %v105
    %v250 = vunpack.c.l.b16 %v106
    %v251 = vunpack.c.l.b16 %v107
    %v252 = vunpack.c.l.b16 %v108
    %v253 = vunpack.c.l.b16 %v109
    %v254 = vunpack.c.l.b16 %v110
    %v255 = vunpack.c.l.b16 %v111
    %v256 = vunpack.c.l.b16 %v112
    %v257 = vunpack.c.l.b16 %v113
    %v258 = vpack.c.b16 %v195, %v194
    %v259 = vpack.c.b16 %v197, %v196
    %v260 = vpack.c.b16 %v199, %v198
    %v261 = vpack.c.b16 %v201, %v200
    %v262 = vpack.c.b16 %v203, %v202
    %v263 = vpack.c.b16 %v205, %v204
    %v264 = vpack.c.b16 %v207, %v206
    %v265 = vpack.c.b16 %v209, %v208
    %v266 = vpack.c.b16 %v211, %v210
    %v267 = vpack.c.b16 %v213, %v212
    %v268 = vpack.c.b16 %v215, %v214
    %v269 = vpack.c.b16 %v217, %v216
    %v270 = vpack.c.b16 %v219, %v218
    %v271 = vpack.c.b16 %v221, %v220
    %v272 = vpack.c.b16 %v223, %v222
    %v273 = vpack.c.b16 %v225, %v224
    %v274 = vpack.c.b16 %v227, %v226
    %v275 = vpack.c.b16 %v229, %v228
    %v276 = vpack.c.b16 %v231, %v230
    %v277 = vpack.c.b16 %v233, %v232
    %v278 = vpack.c.b16 %v235, %v234
    %v279 = vpack.c.b16 %v237, %v236
    %v280 = vpack.c.b16 %v239, %v238
    %v281 = vpack.c.b16 %v241, %v240
    %v282 = vpack.c.b16 %v243, %v242
    %v283 = vpack.c.b16 %v245, %v244
    %v284 = vpack.c.b16 %v247, %v246
    %v285 = vpack.c.b16 %v249, %v248
    %v286 = vpack.c.b16 %v251, %v250
    %v287 = vpack.c.b16 %v253, %v252
    %v288 = vpack.c.b16 %v255, %v254
    %v289 = vpack.c.b16 %v257, %v256
    %v338 = vunpack.c.l.b16 %v114
    %v339 = vunpack.c.h.b16 %v114
    %v340 = vunpack.c.l.b16 %v115
    %v341 = vunpack.c.h.b16 %v115
    %v342 = vunpack.c.l.b16 %v116
    %v343 = vunpack.c.h.b16 %v116
    %v344 = vunpack.c.l.b16 %v117
    %v345 = vunpack.c.h.b16 %v117
    %v346 = vunpack.c.l.b16 %v118
    %v347 = vunpack.c.h.b16 %v118
    %v348 = vunpack.c.l.b16 %v119
    %v349 = vunpack.c.h.b16 %v119
    %v350 = vunpack.c.l.b16 %v120
    %v351 = vunpack.c.h.b16 %v120
    %v352 = vunpack.c.l.b16 %v121
    %v353 = vunpack.c.h.b16 %v121
    %v354 = vunpack.c.l.b16 %v122
    %v355 = vunpack.c.h.b16 %v122
    %v356 = vunpack.c.l.b16 %v123
    %v357 = vunpack.c.h.b16 %v123
    %v358 = vunpack.c.l.b16 %v124
    %v359 = vunpack.c.h.b16 %v124
    %v360 = vunpack.c.l.b16 %v125
    %v361 = vunpack.c.h.b16 %v125
    %v362 = vunpack.c.l.b16 %v126
    %v363 = vunpack.c.h.b16 %v126
    %v364 = vunpack.c.l.b16 %v127
    %v365 = vunpack.c.h.b16 %v127
    %v366 = vunpack.c.l.b16 %v128
    %v367 = vunpack.c.h.b16 %v128
    %v368 = vunpack.c.l.b16 %v129
    %v369 = vunpack.c.h.b16 %v129
    %v370 = vpack.c.b16 %v340, %v338
    %v371 = vpack.c.b16 %v341, %v339
    %v372 = vpack.c.b16 %v344, %v342
    %v373 = vpack.c.b16 %v345, %v343
    %v374 = vpack.c.b16 %v348, %v346
    %v375 = vpack.c.b16 %v349, %v347
    %v376 = vpack.c.b16 %v352, %v350
    %v377 = vpack.c.b16 %v353, %v351
    %v378 = vpack.c.b16 %v356, %v354
    %v379 = vpack.c.b16 %v357, %v355
    %v380 = vpack.c.b16 %v360, %v358
    %v381 = vpack.c.b16 %v361, %v359
    %v382 = vpack.c.b16 %v364, %v362
    %v383 = vpack.c.b16 %v365, %v363
    %v384 = vpack.c.b16 %v368, %v366
    %v385 = vpack.c.b16 %v369, %v367
    %402 = vmatpush.bf16.msra.mxu0 %v384
    %403 = vmatpush.bf16.msra.mxu0 %v382
    %404 = vmatpush.bf16.msra.mxu0 %v380
    %405 = vmatpush.bf16.msra.mxu0 %v378
    %406 = vmatpush.bf16.msra.mxu0 %v376
    %407 = vmatpush.bf16.msra.mxu0 %v374
    %408 = vmatpush.bf16.msra.mxu0 %v372
    %409 = vmatpush.bf16.msra.mxu0 %v370
    %410 = vmatmul.bf16.gmra.mxu0 %v258
    %v411 = vpop.f32.mrf.mxu0
    %v412 = vadd.f32 0.0, %v411
    %v413 = vpop.f32.mrf.mxu0
    %v414 = vadd.f32 0.0, %v413
    %415 = vmatmul.bf16.gmra.mxu0 %v259
    %v416 = vpop.f32.mrf.mxu0
    %v417 = vadd.f32 0.0, %v416
    %v418 = vpop.f32.mrf.mxu0
    %v419 = vadd.f32 0.0, %v418
    %420 = vmatmul.bf16.gmra.mxu0 %v260
    %v421 = vpop.f32.mrf.mxu0
    %v422 = vadd.f32 0.0, %v421
    %v423 = vpop.f32.mrf.mxu0
    %v424 = vadd.f32 0.0, %v423
    %425 = vmatmul.bf16.gmra.mxu0 %v261
    %v426 = vpop.f32.mrf.mxu0
    %v427 = vadd.f32 0.0, %v426
    %v428 = vpop.f32.mrf.mxu0
    %v429 = vadd.f32 0.0, %v428
    %430 = vmatmul.bf16.gmra.mxu0 %v262
    %v431 = vpop.f32.mrf.mxu0
    %v432 = vadd.f32 0.0, %v431
    %v433 = vpop.f32.mrf.mxu0
    %v434 = vadd.f32 0.0, %v433
    %435 = vmatmul.bf16.gmra.mxu0 %v263
    %v436 = vpop.f32.mrf.mxu0
    %v437 = vadd.f32 0.0, %v436
    %v438 = vpop.f32.mrf.mxu0
    %v439 = vadd.f32 0.0, %v438
    %440 = vmatmul.bf16.gmra.mxu0 %v264
    %v441 = vpop.f32.mrf.mxu0
    %v442 = vadd.f32 0.0, %v441
    %v443 = vpop.f32.mrf.mxu0
    %v444 = vadd.f32 0.0, %v443
    %445 = vmatmul.bf16.gmra.mxu0 %v265
    %v446 = vpop.f32.mrf.mxu0
    %v447 = vadd.f32 0.0, %v446
    %v448 = vpop.f32.mrf.mxu0
    %v449 = vadd.f32 0.0, %v448
    %450 = vmatmul.bf16.gmra.mxu0 %v266
    %v451 = vpop.f32.mrf.mxu0
    %v452 = vadd.f32 0.0, %v451
    %v453 = vpop.f32.mrf.mxu0
    %v454 = vadd.f32 0.0, %v453
    %455 = vmatmul.bf16.gmra.mxu0 %v267
    %v456 = vpop.f32.mrf.mxu0
    %v457 = vadd.f32 0.0, %v456
    %v458 = vpop.f32.mrf.mxu0
    %v459 = vadd.f32 0.0, %v458
    %460 = vmatmul.bf16.gmra.mxu0 %v268
    %v461 = vpop.f32.mrf.mxu0
    %v462 = vadd.f32 0.0, %v461
    %v463 = vpop.f32.mrf.mxu0
    %v464 = vadd.f32 0.0, %v463
    %465 = vmatmul.bf16.gmra.mxu0 %v269
    %v466 = vpop.f32.mrf.mxu0
    %v467 = vadd.f32 0.0, %v466
    %v468 = vpop.f32.mrf.mxu0
    %v469 = vadd.f32 0.0, %v468
    %470 = vmatmul.bf16.gmra.mxu0 %v270
    %v471 = vpop.f32.mrf.mxu0
    %v472 = vadd.f32 0.0, %v471
    %v473 = vpop.f32.mrf.mxu0
    %v474 = vadd.f32 0.0, %v473
    %475 = vmatmul.bf16.gmra.mxu0 %v271
    %v476 = vpop.f32.mrf.mxu0
    %v477 = vadd.f32 0.0, %v476
    %v478 = vpop.f32.mrf.mxu0
    %v479 = vadd.f32 0.0, %v478
    %480 = vmatmul.bf16.gmra.mxu0 %v272
    %v481 = vpop.f32.mrf.mxu0
    %v482 = vadd.f32 0.0, %v481
    %v483 = vpop.f32.mrf.mxu0
    %v484 = vadd.f32 0.0, %v483
    %485 = vmatmul.bf16.gmra.mxu0 %v273
    %v486 = vpop.f32.mrf.mxu0
    %v487 = vadd.f32 0.0, %v486
    %v488 = vpop.f32.mrf.mxu0
    %v489 = vadd.f32 0.0, %v488
    %490 = vmatmul.bf16.gmra.mxu0 %v274
    %v491 = vpop.f32.mrf.mxu0
    %v492 = vadd.f32 0.0, %v491
    %v493 = vpop.f32.mrf.mxu0
    %v494 = vadd.f32 0.0, %v493
    %495 = vmatmul.bf16.gmra.mxu0 %v275
    %v496 = vpop.f32.mrf.mxu0
    %v497 = vadd.f32 0.0, %v496
    %v498 = vpop.f32.mrf.mxu0
    %v499 = vadd.f32 0.0, %v498
    %500 = vmatmul.bf16.gmra.mxu0 %v276
    %v501 = vpop.f32.mrf.mxu0
    %v502 = vadd.f32 0.0, %v501
    %v503 = vpop.f32.mrf.mxu0
    %v504 = vadd.f32 0.0, %v503
    %505 = vmatmul.bf16.gmra.mxu0 %v277
    %v506 = vpop.f32.mrf.mxu0
    %v507 = vadd.f32 0.0, %v506
    %v508 = vpop.f32.mrf.mxu0
    %v509 = vadd.f32 0.0, %v508
    %510 = vmatmul.bf16.gmra.mxu0 %v278
    %v511 = vpop.f32.mrf.mxu0
    %v512 = vadd.f32 0.0, %v511
    %v513 = vpop.f32.mrf.mxu0
    %v514 = vadd.f32 0.0, %v513
    %515 = vmatmul.bf16.gmra.mxu0 %v279
    %v516 = vpop.f32.mrf.mxu0
    %v517 = vadd.f32 0.0, %v516
    %v518 = vpop.f32.mrf.mxu0
    %v519 = vadd.f32 0.0, %v518
    %520 = vmatmul.bf16.gmra.mxu0 %v280
    %v521 = vpop.f32.mrf.mxu0
    %v522 = vadd.f32 0.0, %v521
    %v523 = vpop.f32.mrf.mxu0
    %v524 = vadd.f32 0.0, %v523
    %525 = vmatmul.bf16.gmra.mxu0 %v281
    %v526 = vpop.f32.mrf.mxu0
    %v527 = vadd.f32 0.0, %v526
    %v528 = vpop.f32.mrf.mxu0
    %v529 = vadd.f32 0.0, %v528
    %530 = vmatmul.bf16.gmra.mxu0 %v282
    %v531 = vpop.f32.mrf.mxu0
    %v532 = vadd.f32 0.0, %v531
    %v533 = vpop.f32.mrf.mxu0
    %v534 = vadd.f32 0.0, %v533
    %535 = vmatmul.bf16.gmra.mxu0 %v283
    %v536 = vpop.f32.mrf.mxu0
    %v537 = vadd.f32 0.0, %v536
    %v538 = vpop.f32.mrf.mxu0
    %v539 = vadd.f32 0.0, %v538
    %540 = vmatmul.bf16.gmra.mxu0 %v284
    %v541 = vpop.f32.mrf.mxu0
    %v542 = vadd.f32 0.0, %v541
    %v543 = vpop.f32.mrf.mxu0
    %v544 = vadd.f32 0.0, %v543
    %545 = vmatmul.bf16.gmra.mxu0 %v285
    %v546 = vpop.f32.mrf.mxu0
    %v547 = vadd.f32 0.0, %v546
    %v548 = vpop.f32.mrf.mxu0
    %v549 = vadd.f32 0.0, %v548
    %550 = vmatmul.bf16.gmra.mxu0 %v286
    %v551 = vpop.f32.mrf.mxu0
    %v552 = vadd.f32 0.0, %v551
    %v553 = vpop.f32.mrf.mxu0
    %v554 = vadd.f32 0.0, %v553
    %555 = vmatmul.bf16.gmra.mxu0 %v287
    %v556 = vpop.f32.mrf.mxu0
    %v557 = vadd.f32 0.0, %v556
    %v558 = vpop.f32.mrf.mxu0
    %v559 = vadd.f32 0.0, %v558
    %560 = vmatmul.bf16.gmra.mxu0 %v288
    %v561 = vpop.f32.mrf.mxu0
    %v562 = vadd.f32 0.0, %v561
    %v563 = vpop.f32.mrf.mxu0
    %v564 = vadd.f32 0.0, %v563
    %565 = vmatmul.bf16.gmra.mxu0 %v289
    %v566 = vpop.f32.mrf.mxu0
    %v567 = vadd.f32 0.0, %v566
    %v568 = vpop.f32.mrf.mxu0
    %v569 = vadd.f32 0.0, %v568
    %570 = vdwg.mxu0
    %571 = vmatpush.bf16.msra.mxu0 %v385
    %572 = vmatpush.bf16.msra.mxu0 %v383
    %573 = vmatpush.bf16.msra.mxu0 %v381
    %574 = vmatpush.bf16.msra.mxu0 %v379
    %575 = vmatpush.bf16.msra.mxu0 %v377
    %576 = vmatpush.bf16.msra.mxu0 %v375
    %577 = vmatpush.bf16.msra.mxu0 %v373
    %578 = vmatpush.bf16.msra.mxu0 %v371
    %579 = vmatmul.bf16.gmra.mxu0 %v258
    %v580 = vpop.f32.mrf.mxu0
    %v581 = vadd.f32 0.0, %v580
    %v582 = vpop.f32.mrf.mxu0
    %v583 = vadd.f32 0.0, %v582
    %584 = vmatmul.bf16.gmra.mxu0 %v259
    %v585 = vpop.f32.mrf.mxu0
    %v586 = vadd.f32 0.0, %v585
    %v587 = vpop.f32.mrf.mxu0
    %v588 = vadd.f32 0.0, %v587
    %589 = vmatmul.bf16.gmra.mxu0 %v260
    %v590 = vpop.f32.mrf.mxu0
    %v591 = vadd.f32 0.0, %v590
    %v592 = vpop.f32.mrf.mxu0
    %v593 = vadd.f32 0.0, %v592
    %594 = vmatmul.bf16.gmra.mxu0 %v261
    %v595 = vpop.f32.mrf.mxu0
    %v596 = vadd.f32 0.0, %v595
    %v597 = vpop.f32.mrf.mxu0
    %v598 = vadd.f32 0.0, %v597
    %599 = vmatmul.bf16.gmra.mxu0 %v262
    %v600 = vpop.f32.mrf.mxu0
    %v601 = vadd.f32 0.0, %v600
    %v602 = vpop.f32.mrf.mxu0
    %v603 = vadd.f32 0.0, %v602
    %604 = vmatmul.bf16.gmra.mxu0 %v263
    %v605 = vpop.f32.mrf.mxu0
    %v606 = vadd.f32 0.0, %v605
    %v607 = vpop.f32.mrf.mxu0
    %v608 = vadd.f32 0.0, %v607
    %609 = vmatmul.bf16.gmra.mxu0 %v264
    %v610 = vpop.f32.mrf.mxu0
    %v611 = vadd.f32 0.0, %v610
    %v612 = vpop.f32.mrf.mxu0
    %v613 = vadd.f32 0.0, %v612
    %614 = vmatmul.bf16.gmra.mxu0 %v265
    %v615 = vpop.f32.mrf.mxu0
    %v616 = vadd.f32 0.0, %v615
    %v617 = vpop.f32.mrf.mxu0
    %v618 = vadd.f32 0.0, %v617
    %619 = vmatmul.bf16.gmra.mxu0 %v266
    %v620 = vpop.f32.mrf.mxu0
    %v621 = vadd.f32 0.0, %v620
    %v622 = vpop.f32.mrf.mxu0
    %v623 = vadd.f32 0.0, %v622
    %624 = vmatmul.bf16.gmra.mxu0 %v267
    %v625 = vpop.f32.mrf.mxu0
    %v626 = vadd.f32 0.0, %v625
    %v627 = vpop.f32.mrf.mxu0
    %v628 = vadd.f32 0.0, %v627
    %629 = vmatmul.bf16.gmra.mxu0 %v268
    %v630 = vpop.f32.mrf.mxu0
    %v631 = vadd.f32 0.0, %v630
    %v632 = vpop.f32.mrf.mxu0
    %v633 = vadd.f32 0.0, %v632
    %634 = vmatmul.bf16.gmra.mxu0 %v269
    %v635 = vpop.f32.mrf.mxu0
    %v636 = vadd.f32 0.0, %v635
    %v637 = vpop.f32.mrf.mxu0
    %v638 = vadd.f32 0.0, %v637
    %639 = vmatmul.bf16.gmra.mxu0 %v270
    %v640 = vpop.f32.mrf.mxu0
    %v641 = vadd.f32 0.0, %v640
    %v642 = vpop.f32.mrf.mxu0
    %v643 = vadd.f32 0.0, %v642
    %644 = vmatmul.bf16.gmra.mxu0 %v271
    %v645 = vpop.f32.mrf.mxu0
    %v646 = vadd.f32 0.0, %v645
    %v647 = vpop.f32.mrf.mxu0
    %v648 = vadd.f32 0.0, %v647
    %649 = vmatmul.bf16.gmra.mxu0 %v272
    %v650 = vpop.f32.mrf.mxu0
    %v651 = vadd.f32 0.0, %v650
    %v652 = vpop.f32.mrf.mxu0
    %v653 = vadd.f32 0.0, %v652
    %654 = vmatmul.bf16.gmra.mxu0 %v273
    %v655 = vpop.f32.mrf.mxu0
    %v656 = vadd.f32 0.0, %v655
    %v657 = vpop.f32.mrf.mxu0
    %v658 = vadd.f32 0.0, %v657
    %659 = vmatmul.bf16.gmra.mxu0 %v274
    %v660 = vpop.f32.mrf.mxu0
    %v661 = vadd.f32 0.0, %v660
    %v662 = vpop.f32.mrf.mxu0
    %v663 = vadd.f32 0.0, %v662
    %664 = vmatmul.bf16.gmra.mxu0 %v275
    %v665 = vpop.f32.mrf.mxu0
    %v666 = vadd.f32 0.0, %v665
    %v667 = vpop.f32.mrf.mxu0
    %v668 = vadd.f32 0.0, %v667
    %669 = vmatmul.bf16.gmra.mxu0 %v276
    %v670 = vpop.f32.mrf.mxu0
    %v671 = vadd.f32 0.0, %v670
    %v672 = vpop.f32.mrf.mxu0
    %v673 = vadd.f32 0.0, %v672
    %674 = vmatmul.bf16.gmra.mxu0 %v277
    %v675 = vpop.f32.mrf.mxu0
    %v676 = vadd.f32 0.0, %v675
    %v677 = vpop.f32.mrf.mxu0
    %v678 = vadd.f32 0.0, %v677
    %679 = vmatmul.bf16.gmra.mxu0 %v278
    %v680 = vpop.f32.mrf.mxu0
    %v681 = vadd.f32 0.0, %v680
    %v682 = vpop.f32.mrf.mxu0
    %v683 = vadd.f32 0.0, %v682
    %684 = vmatmul.bf16.gmra.mxu0 %v279
    %v685 = vpop.f32.mrf.mxu0
    %v686 = vadd.f32 0.0, %v685
    %v687 = vpop.f32.mrf.mxu0
    %v688 = vadd.f32 0.0, %v687
    %689 = vmatmul.bf16.gmra.mxu0 %v280
    %v690 = vpop.f32.mrf.mxu0
    %v691 = vadd.f32 0.0, %v690
    %v692 = vpop.f32.mrf.mxu0
    %v693 = vadd.f32 0.0, %v692
    %694 = vmatmul.bf16.gmra.mxu0 %v281
    %v695 = vpop.f32.mrf.mxu0
    %v696 = vadd.f32 0.0, %v695
    %v697 = vpop.f32.mrf.mxu0
    %v698 = vadd.f32 0.0, %v697
    %699 = vmatmul.bf16.gmra.mxu0 %v282
    %v700 = vpop.f32.mrf.mxu0
    %v701 = vadd.f32 0.0, %v700
    %v702 = vpop.f32.mrf.mxu0
    %v703 = vadd.f32 0.0, %v702
    %704 = vmatmul.bf16.gmra.mxu0 %v283
    %v705 = vpop.f32.mrf.mxu0
    %v706 = vadd.f32 0.0, %v705
    %v707 = vpop.f32.mrf.mxu0
    %v708 = vadd.f32 0.0, %v707
    %709 = vmatmul.bf16.gmra.mxu0 %v284
    %v710 = vpop.f32.mrf.mxu0
    %v711 = vadd.f32 0.0, %v710
    %v712 = vpop.f32.mrf.mxu0
    %v713 = vadd.f32 0.0, %v712
    %714 = vmatmul.bf16.gmra.mxu0 %v285
    %v715 = vpop.f32.mrf.mxu0
    %v716 = vadd.f32 0.0, %v715
    %v717 = vpop.f32.mrf.mxu0
    %v718 = vadd.f32 0.0, %v717
    %719 = vmatmul.bf16.gmra.mxu0 %v286
    %v720 = vpop.f32.mrf.mxu0
    %v721 = vadd.f32 0.0, %v720
    %v722 = vpop.f32.mrf.mxu0
    %v723 = vadd.f32 0.0, %v722
    %724 = vmatmul.bf16.gmra.mxu0 %v287
    %v725 = vpop.f32.mrf.mxu0
    %v726 = vadd.f32 0.0, %v725
    %v727 = vpop.f32.mrf.mxu0
    %v728 = vadd.f32 0.0, %v727
    %729 = vmatmul.bf16.gmra.mxu0 %v288
    %v730 = vpop.f32.mrf.mxu0
    %v731 = vadd.f32 0.0, %v730
    %v732 = vpop.f32.mrf.mxu0
    %v733 = vadd.f32 0.0, %v732
    %734 = vmatmul.bf16.gmra.mxu0 %v289
    %v735 = vpop.f32.mrf.mxu0
    %v736 = vadd.f32 0.0, %v735
    %v737 = vpop.f32.mrf.mxu0
    %v738 = vadd.f32 0.0, %v737
    %739 = vdwg.mxu0
    %v740 = vpack.c.bf16 %v412, %v412
    %v741 = vpack.c.bf16 %v414, %v414
    %v742 = vpack.c.bf16 %v417, %v417
    %v743 = vpack.c.bf16 %v419, %v419
    %v744 = vpack.c.bf16 %v422, %v422
    %v745 = vpack.c.bf16 %v424, %v424
    %v746 = vpack.c.bf16 %v427, %v427
    %v747 = vpack.c.bf16 %v429, %v429
    %v748 = vpack.c.bf16 %v432, %v432
    %v749 = vpack.c.bf16 %v434, %v434
    %v750 = vpack.c.bf16 %v437, %v437
    %v751 = vpack.c.bf16 %v439, %v439
    %v752 = vpack.c.bf16 %v442, %v442
    %v753 = vpack.c.bf16 %v444, %v444
    %v754 = vpack.c.bf16 %v447, %v447
    %v755 = vpack.c.bf16 %v449, %v449
    %v756 = vpack.c.bf16 %v452, %v452
    %v757 = vpack.c.bf16 %v454, %v454
    %v758 = vpack.c.bf16 %v457, %v457
    %v759 = vpack.c.bf16 %v459, %v459
    %v760 = vpack.c.bf16 %v462, %v462
    %v761 = vpack.c.bf16 %v464, %v464
    %v762 = vpack.c.bf16 %v467, %v467
    %v763 = vpack.c.bf16 %v469, %v469
    %v764 = vpack.c.bf16 %v472, %v472
    %v765 = vpack.c.bf16 %v474, %v474
    %v766 = vpack.c.bf16 %v477, %v477
    %v767 = vpack.c.bf16 %v479, %v479
    %v768 = vpack.c.bf16 %v482, %v482
    %v769 = vpack.c.bf16 %v484, %v484
    %v770 = vpack.c.bf16 %v487, %v487
    %v771 = vpack.c.bf16 %v489, %v489
    %v772 = vpack.c.bf16 %v492, %v492
    %v773 = vpack.c.bf16 %v494, %v494
    %v774 = vpack.c.bf16 %v497, %v497
    %v775 = vpack.c.bf16 %v499, %v499
    %v776 = vpack.c.bf16 %v502, %v502
    %v777 = vpack.c.bf16 %v504, %v504
    %v778 = vpack.c.bf16 %v507, %v507
    %v779 = vpack.c.bf16 %v509, %v509
    %v780 = vpack.c.bf16 %v512, %v512
    %v781 = vpack.c.bf16 %v514, %v514
    %v782 = vpack.c.bf16 %v517, %v517
    %v783 = vpack.c.bf16 %v519, %v519
    %v784 = vpack.c.bf16 %v522, %v522
    %v785 = vpack.c.bf16 %v524, %v524
    %v786 = vpack.c.bf16 %v527, %v527
    %v787 = vpack.c.bf16 %v529, %v529
    %v788 = vpack.c.bf16 %v532, %v532
    %v789 = vpack.c.bf16 %v534, %v534
    %v790 = vpack.c.bf16 %v537, %v537
    %v791 = vpack.c.bf16 %v539, %v539
    %v792 = vpack.c.bf16 %v542, %v542
    %v793 = vpack.c.bf16 %v544, %v544
    %v794 = vpack.c.bf16 %v547, %v547
    %v795 = vpack.c.bf16 %v549, %v549
    %v796 = vpack.c.bf16 %v552, %v552
    %v797 = vpack.c.bf16 %v554, %v554
    %v798 = vpack.c.bf16 %v557, %v557
    %v799 = vpack.c.bf16 %v559, %v559
    %v800 = vpack.c.bf16 %v562, %v562
    %v801 = vpack.c.bf16 %v564, %v564
    %v802 = vpack.c.bf16 %v567, %v567
    %v803 = vpack.c.bf16 %v569, %v569
    %804 = vst [vmem:[#allocation7] sm:$0xf] %v740
    %805 = vst [vmem:[#allocation7 + $0x4] sm:$0xf] %v741
    %806 = vst [vmem:[#allocation7 + $0x8] sm:$0xf] %v742
    %807 = vst [vmem:[#allocation7 + $0xc] sm:$0xf] %v743
    %808 = vst [vmem:[#allocation7 + $0x10] sm:$0xf] %v744
    %809 = vst [vmem:[#allocation7 + $0x14] sm:$0xf] %v745
    %810 = vst [vmem:[#allocation7 + $0x18] sm:$0xf] %v746
    %811 = vst [vmem:[#allocation7 + $0x1c] sm:$0xf] %v747
    %812 = vst [vmem:[#allocation7 + $0x20] sm:$0xf] %v748
    %813 = vst [vmem:[#allocation7 + $0x24] sm:$0xf] %v749
    %814 = vst [vmem:[#allocation7 + $0x28] sm:$0xf] %v750
    %815 = vst [vmem:[#allocation7 + $0x2c] sm:$0xf] %v751
    %816 = vst [vmem:[#allocation7 + $0x30] sm:$0xf] %v752
    %817 = vst [vmem:[#allocation7 + $0x34] sm:$0xf] %v753
    %818 = vst [vmem:[#allocation7 + $0x38] sm:$0xf] %v754
    %819 = vst [vmem:[#allocation7 + $0x3c] sm:$0xf] %v755
    %820 = vst [vmem:[#allocation7 + $0x40] sm:$0xf] %v756
    %821 = vst [vmem:[#allocation7 + $0x44] sm:$0xf] %v757
    %822 = vst [vmem:[#allocation7 + $0x48] sm:$0xf] %v758
    %823 = vst [vmem:[#allocation7 + $0x4c] sm:$0xf] %v759
    %824 = vst [vmem:[#allocation7 + $0x50] sm:$0xf] %v760
    %825 = vst [vmem:[#allocation7 + $0x54] sm:$0xf] %v761
    %826 = vst [vmem:[#allocation7 + $0x58] sm:$0xf] %v762
    %827 = vst [vmem:[#allocation7 + $0x5c] sm:$0xf] %v763
    %828 = vst [vmem:[#allocation7 + $0x60] sm:$0xf] %v764
    %829 = vst [vmem:[#allocation7 + $0x64] sm:$0xf] %v765
    %830 = vst [vmem:[#allocation7 + $0x68] sm:$0xf] %v766
    %831 = vst [vmem:[#allocation7 + $0x6c] sm:$0xf] %v767
    %832 = vst [vmem:[#allocation7 + $0x70] sm:$0xf] %v768
    %833 = vst [vmem:[#allocation7 + $0x74] sm:$0xf] %v769
    %834 = vst [vmem:[#allocation7 + $0x78] sm:$0xf] %v770
    %835 = vst [vmem:[#allocation7 + $0x7c] sm:$0xf] %v771
    %836 = vst [vmem:[#allocation7 + $0x80] sm:$0xf] %v772
    %837 = vst [vmem:[#allocation7 + $0x84] sm:$0xf] %v773
    %838 = vst [vmem:[#allocation7 + $0x88] sm:$0xf] %v774
    %839 = vst [vmem:[#allocation7 + $0x8c] sm:$0xf] %v775
    %840 = vst [vmem:[#allocation7 + $0x90] sm:$0xf] %v776
    %841 = vst [vmem:[#allocation7 + $0x94] sm:$0xf] %v777
    %842 = vst [vmem:[#allocation7 + $0x98] sm:$0xf] %v778
    %843 = vst [vmem:[#allocation7 + $0x9c] sm:$0xf] %v779
    %844 = vst [vmem:[#allocation7 + $0xa0] sm:$0xf] %v780
    %845 = vst [vmem:[#allocation7 + $0xa4] sm:$0xf] %v781
    %846 = vst [vmem:[#allocation7 + $0xa8] sm:$0xf] %v782
    %847 = vst [vmem:[#allocation7 + $0xac] sm:$0xf] %v783
    %848 = vst [vmem:[#allocation7 + $0xb0] sm:$0xf] %v784
    %849 = vst [vmem:[#allocation7 + $0xb4] sm:$0xf] %v785
    %850 = vst [vmem:[#allocation7 + $0xb8] sm:$0xf] %v786
    %851 = vst [vmem:[#allocation7 + $0xbc] sm:$0xf] %v787
    %852 = vst [vmem:[#allocation7 + $0xc0] sm:$0xf] %v788
    %853 = vst [vmem:[#allocation7 + $0xc4] sm:$0xf] %v789
    %854 = vst [vmem:[#allocation7 + $0xc8] sm:$0xf] %v790
    %855 = vst [vmem:[#allocation7 + $0xcc] sm:$0xf] %v791
    %856 = vst [vmem:[#allocation7 + $0xd0] sm:$0xf] %v792
    %857 = vst [vmem:[#allocation7 + $0xd4] sm:$0xf] %v793
    %858 = vst [vmem:[#allocation7 + $0xd8] sm:$0xf] %v794
    %859 = vst [vmem:[#allocation7 + $0xdc] sm:$0xf] %v795
    %860 = vst [vmem:[#allocation7 + $0xe0] sm:$0xf] %v796
    %861 = vst [vmem:[#allocation7 + $0xe4] sm:$0xf] %v797
    %862 = vst [vmem:[#allocation7 + $0xe8] sm:$0xf] %v798
    %863 = vst [vmem:[#allocation7 + $0xec] sm:$0xf] %v799
    %864 = vst [vmem:[#allocation7 + $0xf0] sm:$0xf] %v800
    %865 = vst [vmem:[#allocation7 + $0xf4] sm:$0xf] %v801
    %866 = vst [vmem:[#allocation7 + $0xf8] sm:$0xf] %v802
    %867 = vst [vmem:[#allocation7 + $0xfc] sm:$0xf] %v803
    %v868 = vld [vmem:[%s2] sm:$0x1]
    %v870 = vperm.slane %v868, 0
    %v872 = vadd.f32 %v581, %v870
    %v873 = vadd.f32 %v583, %v870
    %v874 = vadd.f32 %v586, %v870
    %v875 = vadd.f32 %v588, %v870
    %v876 = vadd.f32 %v591, %v870
    %v877 = vadd.f32 %v593, %v870
    %v878 = vadd.f32 %v596, %v870
    %v879 = vadd.f32 %v598, %v870
    %v880 = vadd.f32 %v601, %v870
    %v881 = vadd.f32 %v603, %v870
    %v882 = vadd.f32 %v606, %v870
    %v883 = vadd.f32 %v608, %v870
    %v884 = vadd.f32 %v611, %v870
    %v885 = vadd.f32 %v613, %v870
    %v886 = vadd.f32 %v616, %v870
    %v887 = vadd.f32 %v618, %v870
    %v888 = vadd.f32 %v621, %v870
    %v889 = vadd.f32 %v623, %v870
    %v890 = vadd.f32 %v626, %v870
    %v891 = vadd.f32 %v628, %v870
    %v892 = vadd.f32 %v631, %v870
    %v893 = vadd.f32 %v633, %v870
    %v894 = vadd.f32 %v636, %v870
    %v895 = vadd.f32 %v638, %v870
    %v896 = vadd.f32 %v641, %v870
    %v897 = vadd.f32 %v643, %v870
    %v898 = vadd.f32 %v646, %v870
    %v899 = vadd.f32 %v648, %v870
    %v900 = vadd.f32 %v651, %v870
    %v901 = vadd.f32 %v653, %v870
    %v902 = vadd.f32 %v656, %v870
    %v903 = vadd.f32 %v658, %v870
    %v904 = vadd.f32 %v661, %v870
    %v905 = vadd.f32 %v663, %v870
    %v906 = vadd.f32 %v666, %v870
    %v907 = vadd.f32 %v668, %v870
    %v908 = vadd.f32 %v671, %v870
    %v909 = vadd.f32 %v673, %v870
    %v910 = vadd.f32 %v676, %v870
    %v911 = vadd.f32 %v678, %v870
    %v912 = vadd.f32 %v681, %v870
    %v913 = vadd.f32 %v683, %v870
    %v914 = vadd.f32 %v686, %v870
    %v915 = vadd.f32 %v688, %v870
    %v916 = vadd.f32 %v691, %v870
    %v917 = vadd.f32 %v693, %v870
    %v918 = vadd.f32 %v696, %v870
    %v919 = vadd.f32 %v698, %v870
    %v920 = vadd.f32 %v701, %v870
    %v921 = vadd.f32 %v703, %v870
    %v922 = vadd.f32 %v706, %v870
    %v923 = vadd.f32 %v708, %v870
    %v924 = vadd.f32 %v711, %v870
    %v925 = vadd.f32 %v713, %v870
    %v926 = vadd.f32 %v716, %v870
    %v927 = vadd.f32 %v718, %v870
    %v928 = vadd.f32 %v721, %v870
    %v929 = vadd.f32 %v723, %v870
    %v930 = vadd.f32 %v726, %v870
    %v931 = vadd.f32 %v728, %v870
    %v932 = vadd.f32 %v731, %v870
    %v933 = vadd.f32 %v733, %v870
    %v934 = vadd.f32 %v736, %v870
    %v935 = vadd.f32 %v738, %v870
    %936 = vst [vmem:[#allocation8] sm:$0xff] %v872
    %937 = vst [vmem:[#allocation8 + $0x8] sm:$0xff] %v873
    %938 = vst [vmem:[#allocation8 + $0x10] sm:$0xff] %v874
    %939 = vst [vmem:[#allocation8 + $0x18] sm:$0xff] %v875
    %940 = vst [vmem:[#allocation8 + $0x20] sm:$0xff] %v876
    %941 = vst [vmem:[#allocation8 + $0x28] sm:$0xff] %v877
    %942 = vst [vmem:[#allocation8 + $0x30] sm:$0xff] %v878
    %943 = vst [vmem:[#allocation8 + $0x38] sm:$0xff] %v879
    %944 = vst [vmem:[#allocation8 + $0x40] sm:$0xff] %v880
    %945 = vst [vmem:[#allocation8 + $0x48] sm:$0xff] %v881
    %946 = vst [vmem:[#allocation8 + $0x50] sm:$0xff] %v882
    %947 = vst [vmem:[#allocation8 + $0x58] sm:$0xff] %v883
    %948 = vst [vmem:[#allocation8 + $0x60] sm:$0xff] %v884
    %949 = vst [vmem:[#allocation8 + $0x68] sm:$0xff] %v885
    %950 = vst [vmem:[#allocation8 + $0x70] sm:$0xff] %v886
    %951 = vst [vmem:[#allocation8 + $0x78] sm:$0xff] %v887
    %952 = vst [vmem:[#allocation8 + $0x80] sm:$0xff] %v888
    %953 = vst [vmem:[#allocation8 + $0x88] sm:$0xff] %v889
    %954 = vst [vmem:[#allocation8 + $0x90] sm:$0xff] %v890
    %955 = vst [vmem:[#allocation8 + $0x98] sm:$0xff] %v891
    %956 = vst [vmem:[#allocation8 + $0xa0] sm:$0xff] %v892
    %957 = vst [vmem:[#allocation8 + $0xa8] sm:$0xff] %v893
    %958 = vst [vmem:[#allocation8 + $0xb0] sm:$0xff] %v894
    %959 = vst [vmem:[#allocation8 + $0xb8] sm:$0xff] %v895
    %960 = vst [vmem:[#allocation8 + $0xc0] sm:$0xff] %v896
    %961 = vst [vmem:[#allocation8 + $0xc8] sm:$0xff] %v897
    %962 = vst [vmem:[#allocation8 + $0xd0] sm:$0xff] %v898
    %963 = vst [vmem:[#allocation8 + $0xd8] sm:$0xff] %v899
    %964 = vst [vmem:[#allocation8 + $0xe0] sm:$0xff] %v900
    %965 = vst [vmem:[#allocation8 + $0xe8] sm:$0xff] %v901
    %966 = vst [vmem:[#allocation8 + $0xf0] sm:$0xff] %v902
    %967 = vst [vmem:[#allocation8 + $0xf8] sm:$0xff] %v903
    %968 = vst [vmem:[#allocation8 + $0x100] sm:$0xff] %v904
    %969 = vst [vmem:[#allocation8 + $0x108] sm:$0xff] %v905
    %970 = vst [vmem:[#allocation8 + $0x110] sm:$0xff] %v906
    %971 = vst [vmem:[#allocation8 + $0x118] sm:$0xff] %v907
    %972 = vst [vmem:[#allocation8 + $0x120] sm:$0xff] %v908
    %973 = vst [vmem:[#allocation8 + $0x128] sm:$0xff] %v909
    %974 = vst [vmem:[#allocation8 + $0x130] sm:$0xff] %v910
    %975 = vst [vmem:[#allocation8 + $0x138] sm:$0xff] %v911
    %976 = vst [vmem:[#allocation8 + $0x140] sm:$0xff] %v912
    %977 = vst [vmem:[#allocation8 + $0x148] sm:$0xff] %v913
    %978 = vst [vmem:[#allocation8 + $0x150] sm:$0xff] %v914
    %979 = vst [vmem:[#allocation8 + $0x158] sm:$0xff] %v915
    %980 = vst [vmem:[#allocation8 + $0x160] sm:$0xff] %v916
    %981 = vst [vmem:[#allocation8 + $0x168] sm:$0xff] %v917
    %982 = vst [vmem:[#allocation8 + $0x170] sm:$0xff] %v918
    %983 = vst [vmem:[#allocation8 + $0x178] sm:$0xff] %v919
    %984 = vst [vmem:[#allocation8 + $0x180] sm:$0xff] %v920
    %985 = vst [vmem:[#allocation8 + $0x188] sm:$0xff] %v921
    %986 = vst [vmem:[#allocation8 + $0x190] sm:$0xff] %v922
    %987 = vst [vmem:[#allocation8 + $0x198] sm:$0xff] %v923
    %988 = vst [vmem:[#allocation8 + $0x1a0] sm:$0xff] %v924
    %989 = vst [vmem:[#allocation8 + $0x1a8] sm:$0xff] %v925
    %990 = vst [vmem:[#allocation8 + $0x1b0] sm:$0xff] %v926
    %991 = vst [vmem:[#allocation8 + $0x1b8] sm:$0xff] %v927
    %992 = vst [vmem:[#allocation8 + $0x1c0] sm:$0xff] %v928
    %993 = vst [vmem:[#allocation8 + $0x1c8] sm:$0xff] %v929
    %994 = vst [vmem:[#allocation8 + $0x1d0] sm:$0xff] %v930
    %995 = vst [vmem:[#allocation8 + $0x1d8] sm:$0xff] %v931
    %996 = vst [vmem:[#allocation8 + $0x1e0] sm:$0xff] %v932
    %997 = vst [vmem:[#allocation8 + $0x1e8] sm:$0xff] %v933
    %998 = vst [vmem:[#allocation8 + $0x1f0] sm:$0xff] %v934
    %999 = vst [vmem:[#allocation8 + $0x1f8] sm:$0xff] %v935
    // Predicated region
    $region22: #{tpu_custom_call.1} parent=1 // pred_check
      _
    $region23: #{tpu_custom_call.1} parent=1 // pred_check_branch
      %1001 = sbr.rel (0) target = $region25
    $region24: #{tpu_custom_call.1} parent=1 // pred_region
      %1003 = vsyncadd [#allocation4], 0
      %s1004 = sshll.u32 [#allocation7], 4
      %s1005 = int_to_ptr.vmem [resolvable:$true] %s1004
      %s1006 = sshll.u32 %s3, 4
      %s1007 = int_to_ptr.hbm [resolvable:$true] %s1006
      %1012 = dma.vmem_to_hbm [thread:$0]  %s1005, 4096, %s1007, [#allocation4], 64, 64, 4
    $region25: #{tpu_custom_call.1} parent=1 // pred_fallthru
      _
    // Predicated region
    $region26: #{tpu_custom_call.1} parent=1 // pred_check
      _
    $region27: #{tpu_custom_call.1} parent=1 // pred_check_branch
      %1014 = sbr.rel (0) target = $region29
    $region28: #{tpu_custom_call.1} parent=1 // pred_region
      %1016 = vsyncadd [#allocation9], 0
      %s1017 = sshll.u32 [#allocation8], 4
      %s1018 = int_to_ptr.vmem [resolvable:$true] %s1017
      %s1019 = sshll.u32 %s4, 4
      %s1020 = int_to_ptr.hbm [resolvable:$true] %s1019
      %1025 = dma.vmem_to_hbm [thread:$0]  %s1018, 8192, %s1020, [#allocation9], 128, 128, 8
    $region29: #{tpu_custom_call.1} parent=1 // pred_fallthru
      _
    // Predicated region
    $region30: #{tpu_custom_call.1} parent=1 // pred_check
      _
    $region31: #{tpu_custom_call.1} parent=1 // pred_check_branch
      %1027 = sbr.rel (0) target = $region33
    $region32: #{tpu_custom_call.1} parent=1 // pred_region
      %1029 = dma.done [#allocation4], 4096
    $region33: #{tpu_custom_call.1} parent=1 // pred_fallthru
      _
    // Predicated region
    $region34: #{tpu_custom_call.1} parent=1 // pred_check
      _
    $region35: #{tpu_custom_call.1} parent=1 // pred_check_branch
      %1031 = sbr.rel (0) target = $region37
    $region36: #{tpu_custom_call.1} parent=1 // pred_region
      %1033 = dma.done [#allocation9], 8192
    $region37: #{tpu_custom_call.1} parent=1 // pred_fallthru
      _
    %1034 = vsyncpa [#allocation3], 1
    %1035 = vsyncpa [#allocation6], 1
    %1036 = vsyncpa [#allocation4], 1
    %1037 = vsyncpa [#allocation9], 1

</llo_original>
